<compile_context>
chip_gen: v6e
topology: v6e:2x2x1
jax: 0.10.0
libtpu: 0.0.40
codegen_flags: <defaults>
</compile_context>

<pallas_src>
import jax
import jax.numpy as jnp
from jax.experimental import pallas as pl
from jax.experimental.pallas import tpu as pltpu


def _attention_kernel(x_ref, w_ref, ctx_ref, attn_ref):
    """Attention over TB batch rows.

    x_ref   : (TB, S, H) VMEM block of lstm_output (native dtype)
    w_ref   : (1, H)     VMEM linear weight (out_features == 1), resident
    ctx_ref : (TB, H)    output context vectors
    attn_ref: (TB, S)    output attention weights (lane-dense)
    """
    x = x_ref[...]                               # (TB, S, H) native dtype
    w = w_ref[...].astype(jnp.float32)           # (1, H)

    # scores[b, s] = sum_h x[b, s, h] * w[h]
    # bf16 * f32 promotes to f32, so accumulation happens in f32; the (TB,S,H)
    # f32 product is a short-lived temp (accounted for in the VMEM budget).
    # NOTE: the nn.Linear bias is intentionally omitted: with out_features == 1
    # it shifts every score along the softmax axis by the same constant and
    # cancels exactly in both outputs.
    scores = jnp.sum(x * w[None, :, :], axis=-1)               # (TB, S) f32

    # numerically-stable softmax over the sequence axis (dim=1 of the module),
    # with an EXACT divide (no approximate reciprocal).
    m = jnp.max(scores, axis=-1, keepdims=True)                # (TB, 1)
    e = jnp.exp(scores - m)                                    # (TB, S)
    attn = e / jnp.sum(e, axis=-1, keepdims=True)              # (TB, S) f32

    # context[b, h] = sum_s attn[b, s] * x[b, s, h]
    # Literal translation of torch.sum(attention_weights * lstm_output, dim=1)
    # (VPU multiply + sublane reduce); f32 accumulation via promotion.
    ctx = jnp.sum(attn[:, :, None] * x, axis=1)                # (TB, H) f32

    ctx_ref[...] = ctx.astype(ctx_ref.dtype)
    attn_ref[...] = attn.astype(attn_ref.dtype)


def _vmem_budget_and_limit():
    """Per-core VMEM capacity -> (input-block budget, scoped-VMEM limit)."""
    try:
        cap = int(pltpu.get_tpu_info().vmem_capacity_bytes)
    except Exception:
        cap = 64 * 1024 * 1024          # conservative fallback (v7x per-TC VMEM)
    budget = int(cap * 0.40)            # for the double-buffered input blocks
    limit = int(cap * 0.75)             # explicit scoped-VMEM limit for Mosaic
    return budget, limit


def _choose_block_batch(B: int, S: int, H: int, in_itemsize: int,
                        out_itemsize: int, budget: int) -> int:
    """How many batch rows per grid step (full B, or a multiple of 8)."""
    per_row = 2 * S * H * in_itemsize                 # double-buffered input
    per_row += 2 * S * H * 4                          # in-kernel f32 temps
    per_row += 2 * (S + H) * max(out_itemsize, 4)     # double-buffered outputs
    tb = budget // max(per_row, 1)
    if tb >= B:
        return B                         # single block: block dims == array dims
    tb = (tb // 8) * 8                   # sublane-aligned partial-batch blocks
    # TODO(synk): add an S-tiled online-softmax path for sequences so long that
    # even 8 rows exceed the VMEM budget (breaks first on v7x's 64 MiB).
    return max(tb, min(8, B))


def attention_layer(lstm_output: jax.Array, weight: jax.Array,
                    bias: jax.Array | None = None):
    """Pallas wrapper.

    lstm_output: (B, S, H)
    weight     : (1, H)   (nn.Linear(hidden_dim, 1).weight)
    bias       : (1,)     (nn.Linear(hidden_dim, 1).bias) -- accepted for API
                 parity; it cancels exactly in the softmax so it is not used.
    Returns (context_vector (B, H), attention_weights (B, S, 1)).
    """
    del bias  # constant shift along the softmax axis: no effect on outputs
    B, S, H = lstm_output.shape
    in_itemsize = jnp.dtype(lstm_output.dtype).itemsize
    out_itemsize = in_itemsize

    budget, vmem_limit = _vmem_budget_and_limit()
    tb = _choose_block_batch(B, S, H, in_itemsize, out_itemsize, budget)
    num_blocks = pl.cdiv(B, tb)   # partial last block: rows are independent,
                                  # masked tail writes are safe

    cost = pl.CostEstimate(
        flops=4 * B * S * H,                 # scores mul+add, context mul+add
        transcendentals=B * S,               # exp
        bytes_accessed=in_itemsize * (B * S * H + H)
        + out_itemsize * (B * H + B * S),
    )

    grid_spec = pltpu.PrefetchScalarGridSpec(
        num_scalar_prefetch=0,
        grid=(num_blocks,),
        in_specs=[
            pl.BlockSpec((tb, S, H), lambda i: (i, 0, 0)),   # TB rows / step
            pl.BlockSpec((1, H), lambda i: (0, 0)),          # weight, resident
        ],
        out_specs=[
            pl.BlockSpec((tb, H), lambda i: (i, 0)),         # context
            pl.BlockSpec((tb, S), lambda i: (i, 0)),         # attn, lane-dense
        ],
    )

    ctx, attn = pl.pallas_call(
        _attention_kernel,
        out_shape=(
            jax.ShapeDtypeStruct((B, H), lstm_output.dtype),
            jax.ShapeDtypeStruct((B, S), lstm_output.dtype),
        ),
        grid_spec=grid_spec,
        compiler_params=pltpu.CompilerParams(
            dimension_semantics=("parallel",),
            vmem_limit_bytes=vmem_limit,
        ),
        cost_estimate=cost,
    )(lstm_output, weight)

    # Kernel emits lane-dense (B, S); present (B, S, 1) like the PyTorch module.
    return ctx, attn.reshape(B, S, 1)


def _reference(lstm_output, weight, bias):
    scores = jnp.einsum("bsh,oh->bso", lstm_output, weight) + bias  # (B, S, 1)
    attn = jax.nn.softmax(scores, axis=1)
    ctx = jnp.sum(attn * lstm_output, axis=1)
    return ctx, attn


if __name__ == "__main__":
    key = jax.random.PRNGKey(0)
    k_x, k_w, k_b = jax.random.split(key, 3)

    B, S, H = 2, 8, 32   # batch, seq_len, hidden_dim
    x = jax.random.normal(k_x, (B, S, H), dtype=jnp.float32)

    # Parameters with nn.Linear(hidden_dim, 1) shapes: weight (1, H), bias (1,)
    bound = 1.0 / (H ** 0.5)
    w = jax.random.uniform(k_w, (1, H), minval=-bound, maxval=bound, dtype=jnp.float32)
    b = jax.random.uniform(k_b, (1,), minval=-bound, maxval=bound, dtype=jnp.float32)

    ctx, attn = attention_layer(x, w, b)
    jax.block_until_ready((ctx, attn))

    ctx_ref, attn_ref = _reference(x, w, b)
    assert ctx.shape == (B, H) and attn.shape == (B, S, 1)
    ctx_err = float(jnp.max(jnp.abs(ctx - ctx_ref)))
    attn_err = float(jnp.max(jnp.abs(attn - attn_ref)))
    assert jnp.allclose(ctx, ctx_ref, atol=1e-4, rtol=1e-4), f"ctx max err {ctx_err}"
    assert jnp.allclose(attn, attn_ref, atol=1e-4, rtol=1e-4), f"attn max err {attn_err}"

    print("KERNEL_OK")
</pallas_src>

<mosaic_0001>
module attributes {stable_mosaic.version = 11 : i64} {
  func.func @_attention_kernel(%arg0: i32, %arg1: memref<2x8x32xf32, #tpu.memory_space<vmem>>, %arg2: memref<1x32xf32, #tpu.memory_space<vmem>>, %arg3: memref<2x32xf32, #tpu.memory_space<vmem>>, %arg4: memref<2x8xf32, #tpu.memory_space<vmem>>) attributes {dimension_semantics = [#tpu.dimension_semantics<parallel>], iteration_bounds = array<i64: 1>, scalar_prefetch = 0 : i64, scratch_operands = 0 : i64, tpu.core_type = #tpu.core_type<tc>, window_params = [{transform_indices = @transform_0, window_bounds = array<i64: 2, 8, 32>}, {pipeline_mode = #tpu.pipeline_mode<synchronous>, transform_indices = @transform_1, window_bounds = array<i64: 1, 32>}, {transform_indices = @transform_2, window_bounds = array<i64: 2, 32>}, {transform_indices = @transform_3, window_bounds = array<i64: 2, 8>}]} {
    %c0 = arith.constant 0 : index
    %c0_0 = arith.constant 0 : index
    %c0_1 = arith.constant 0 : index
    %0 = vector.load %arg1[%c0, %c0_0, %c0_1] : memref<2x8x32xf32, #tpu.memory_space<vmem>>, vector<2x8x32xf32>
    %c0_2 = arith.constant 0 : index
    %c0_3 = arith.constant 0 : index
    %1 = vector.load %arg2[%c0_2, %c0_3] : memref<1x32xf32, #tpu.memory_space<vmem>>, vector<1x32xf32>
    %2 = vector.shape_cast %1 : vector<1x32xf32> to vector<1x1x32xf32>
    %3 = vector.broadcast %2 : vector<1x1x32xf32> to vector<2x8x32xf32>
    %4 = arith.mulf %0, %3 : vector<2x8x32xf32>
    %cst = arith.constant dense<0.000000e+00> : vector<2x8xf32>
    %5 = vector.multi_reduction <add>, %4, %cst [2] : vector<2x8x32xf32> to vector<2x8xf32>
    %cst_4 = arith.constant dense<0xFF800000> : vector<2xf32>
    %6 = vector.multi_reduction <maximumf>, %5, %cst_4 [1] : vector<2x8xf32> to vector<2xf32>
    %7 = vector.shape_cast %6 : vector<2xf32> to vector<2x1xf32>
    %8 = vector.broadcast %7 : vector<2x1xf32> to vector<2x8xf32>
    %9 = arith.subf %5, %8 : vector<2x8xf32>
    %10 = math.exp %9 : vector<2x8xf32>
    %cst_5 = arith.constant dense<0.000000e+00> : vector<2xf32>
    %11 = vector.multi_reduction <add>, %10, %cst_5 [1] : vector<2x8xf32> to vector<2xf32>
    %12 = vector.shape_cast %11 : vector<2xf32> to vector<2x1xf32>
    %13 = vector.broadcast %12 : vector<2x1xf32> to vector<2x8xf32>
    %14 = arith.divf %10, %13 : vector<2x8xf32>
    %15 = vector.shape_cast %14 : vector<2x8xf32> to vector<2x8x1xf32>
    %16 = vector.broadcast %15 : vector<2x8x1xf32> to vector<2x8x32xf32>
    %17 = arith.mulf %16, %0 : vector<2x8x32xf32>
    %cst_6 = arith.constant dense<0.000000e+00> : vector<2x32xf32>
    %18 = vector.multi_reduction <add>, %17, %cst_6 [1] : vector<2x8x32xf32> to vector<2x32xf32>
    %c0_7 = arith.constant 0 : index
    %c0_8 = arith.constant 0 : index
    %19 = vector.load %arg3[%c0_7, %c0_8] : memref<2x32xf32, #tpu.memory_space<vmem>>, vector<2x32xf32>
    tpu.vector_store %arg3[%c0_7, %c0_8], %18 {strides = array<i32>} : memref<2x32xf32, #tpu.memory_space<vmem>>, vector<2x32xf32>,
    %c0_9 = arith.constant 0 : index
    %c0_10 = arith.constant 0 : index
    %20 = vector.load %arg4[%c0_9, %c0_10] : memref<2x8xf32, #tpu.memory_space<vmem>>, vector<2x8xf32>
    tpu.vector_store %arg4[%c0_9, %c0_10], %14 {strides = array<i32>} : memref<2x8xf32, #tpu.memory_space<vmem>>, vector<2x8xf32>,
    return
  }
  func.func @transform_0(%arg0: i32) -> (i32, i32, i32) {
    %c0_i32 = arith.constant 0 : i32
    %c0_i32_0 = arith.constant 0 : i32
    %c0_i32_1 = arith.constant 0 : i32
    return %arg0, %c0_i32, %c0_i32_0 : i32, i32, i32
  }
  func.func @transform_1(%arg0: i32) -> (i32, i32) {
    %c0_i32 = arith.constant 0 : i32
    %c0_i32_0 = arith.constant 0 : i32
    %c0_i32_1 = arith.constant 0 : i32
    return %c0_i32, %c0_i32_0 : i32, i32
  }
  func.func @transform_2(%arg0: i32) -> (i32, i32) {
    %c0_i32 = arith.constant 0 : i32
    %c0_i32_0 = arith.constant 0 : i32
    return %arg0, %c0_i32 : i32, i32
  }
  func.func @transform_3(%arg0: i32) -> (i32, i32) {
    %c0_i32 = arith.constant 0 : i32
    %c0_i32_0 = arith.constant 0 : i32
    return %arg0, %c0_i32 : i32, i32
  }
}

</mosaic_0001>

<llo_original>
// kernel: tpu_custom_call.1
$region0: #{tpu_custom_call.1}
  #allocation0 [shape = 'u32[]', space=smem, size = 0x4, offset = 0x4, fixed_abs, tag = 'smem constant byte address 0x4 - core index']
  #allocation1 [shape = 'u32[144,128]{1,0:T(1,128)}', space=vmem, size = 0x12000, scoped, tag = 'internal scratch']
  %s0 = inlined_call_operand.hbm [shape: f32[2,8,32], index: 0, kind: input, shape index: {}]
  %s1 = inlined_call_operand.vmem [shape: f32[1,32], index: 1, kind: input, shape index: {}]
  %s2 = inlined_call_operand.hbm [shape: f32[2,32], index: 2, kind: output, shape index: {0}]
  %s3 = inlined_call_operand.hbm [shape: f32[2,8], index: 3, kind: output, shape index: {1}]
  %4 = xla_tuple %s2, %s3
  %s5 = sld [smem:[#allocation0]]
  $region30: #{tpu_custom_call.1} parent=0
    _
  %s7 = ssub.s32 1, %s5
  %s8 = scalar_select 0, %s7, %s5
  $region1: #{tpu_custom_call.1} parent=0
    #allocation2 [shape = 'u8[8192]{0}', space=vmem, size = 0x2000, scoped, tag = 'input window, operand 0, single buffered']
    #allocation3 [shape = 's32[1]{0}', space=sflag, size = 0x4, scoped, tag = 'scoped memory for tpu_custom_call.1']
    #allocation4 [shape = 's32[1]{0}', space=sflag, size = 0x4, scoped, tag = 'scoped memory for tpu_custom_call.1']
    #allocation5 [shape = 'u8[1024]{0}', space=vmem, size = 0x400, scoped, tag = 'output window, operand 0, single buffered']
    #allocation6 [shape = 'u8[1024]{0}', space=vmem, size = 0x400, scoped, tag = 'output window, operand 1, single buffered']
    #allocation7 [shape = 's32[1]{0}', space=sflag, size = 0x4, scoped, tag = 'scoped memory for tpu_custom_call.1']
    %9 = vsyncpa [#allocation3], 0
    %10 = vsyncpa [#allocation4], 0
    %11 = vsyncpa [#allocation7], 0
    // Predicated region
    $region2: #{tpu_custom_call.1} parent=1 // pred_check
      _
    $region3: #{tpu_custom_call.1} parent=1 // pred_check_branch
      %13 = sbr.rel (0) target = $region5
    $region4: #{tpu_custom_call.1} parent=1 // pred_region
      %s15 = ssub.s32 256, 256
      %16 = vsyncadd [#allocation3], %s15
      %s17 = sshll.u32 [#allocation2], 4
      %s18 = int_to_ptr.vmem [resolvable:$true] %s17
      %23 = dma.hbm_to_vmem [thread:$0]  %s0, 256, %s18, [#allocation3], 128, 128, 8
    $region5: #{tpu_custom_call.1} parent=1 // pred_fallthru
      _
    // Predicated region
    $region6: #{tpu_custom_call.1} parent=1 // pred_check
      _
    $region7: #{tpu_custom_call.1} parent=1 // pred_check_branch
      %25 = sbr.rel (0) target = $region9
    $region8: #{tpu_custom_call.1} parent=1 // pred_region
      _
    $region9: #{tpu_custom_call.1} parent=1 // pred_fallthru
      _
    // Predicated region
    $region10: #{tpu_custom_call.1} parent=1 // pred_check
      _
    $region11: #{tpu_custom_call.1} parent=1 // pred_check_branch
      %27 = sbr.rel (0) target = $region13
    $region12: #{tpu_custom_call.1} parent=1 // pred_region
      %28 = dma.done [#allocation3], 256
    $region13: #{tpu_custom_call.1} parent=1 // pred_fallthru
      _
    %v29 = vld [vmem:[#allocation2] sm:$0xff]
    %v30 = vld [vmem:[#allocation2 + $0x8] sm:$0xff]
    %v31 = vld [vmem:[%s1] sm:$0x1]
    %v33 = vlaneseq
    %v34 = vshrl.u32 %v33, 7
    %v35 = vsub.s32 0, %v34
    %v36 = vrot.slane %v31, %v35
    %v38 = vmul.f32 %v29, %v36
    %v39 = vmul.f32 %v30, %v36
    %vm40 = vcmask 261120
    %v41 = vsel %vm40, %v38, 0.0
    %42 = vadd.xlane.f32.xlu0 %v41
    %v43 = vpop.xlane.xlu0 %42
    %v44 = vsel %vm40, %v39, 0.0
    %45 = vadd.xlane.f32.xlu0 %v44
    %v46 = vpop.xlane.xlu0 %45
    %v49 = vlaneseq
    %v50 = vand.u32 %v49, 127
    %v51 = vlaneseq
    %v52 = vshrl.u32 %v51, 7
    %v53 = vsub.s32 %v50, %v52
    %v54 = vrot.slane %v43, %v53
    %v55 = vlaneseq
    %v56 = vshrl.u32 %v55, 7
    %v57 = vsub.s32 %v50, %v56
    %v58 = vrot.slane %v46, %v57
    %vm59 = vcmask 1041409
    %v60 = vsel %vm59, %v58, %v54
    %vm62 = vcmask 58368
    %v63 = vsel %vm62, %v60, -inf
    %64 = vmax.xlane.f32.xlu0 %v63
    %v65 = vpop.xlane.xlu0 %64
    %v67 = vlaneseq
    %v68 = vshrl.u32 %v67, 7
    %v69 = vsub.s32 0, %v68
    %v70 = vrot.slane %v65, %v69
    %v71 = vlaneseq
    %v72 = vshrl.u32 %v71, 7
    %v73 = vsub.s32 1, %v72
    %v74 = vrot.slane %v65, %v73
    %v77 = vsub.f32 %v43, %v70
    %v78 = vsub.f32 %v46, %v74
    %v79 = vmul.f32 %v77, 1.442695
    %v80 = vpow.pop %v79
    %v81 = vmul.f32 %v78, 1.442695
    %v82 = vpow.pop %v81
    %85 = vset.pattern.permute.xlu0 0
    %86 = vperm.xlu0 %85, %v80
    %v87 = vpop.permute.xlu0 %86
    %88 = vset.pattern.permute.xlu0 0
    %89 = vperm.xlu0 %88, %v82
    %v90 = vpop.permute.xlu0 %89
    %v91 = vlaneseq
    %v92 = vshrl.u32 %v91, 7
    %v93 = vsub.s32 %v50, %v92
    %v94 = vrot.slane %v87, %v93
    %v95 = vlaneseq
    %v96 = vshrl.u32 %v95, 7
    %v97 = vsub.s32 %v50, %v96
    %v98 = vrot.slane %v90, %v97
    %v99 = vsel %vm59, %v98, %v94
    %v101 = vsel %vm62, %v99, 0.0
    %102 = vadd.xlane.f32.xlu0 %v101
    %v103 = vpop.xlane.xlu0 %102
    %v105 = vlaneseq
    %v106 = vshrl.u32 %v105, 7
    %v107 = vsub.s32 0, %v106
    %v108 = vrot.slane %v103, %v107
    %v109 = vlaneseq
    %v110 = vshrl.u32 %v109, 7
    %v111 = vsub.s32 1, %v110
    %v112 = vrot.slane %v103, %v111
    %v115 = vrcp.pop %v108
    %v116 = vmul.f32 %v80, %v115
    %v117 = vrcp.pop %v112
    %v118 = vmul.f32 %v82, %v117
    %120 = vset.pattern.permute.xlu0 0
    %121 = vperm.xlu0 %120, %v116
    %v122 = vpop.permute.xlu0 %121
    %125 = vset.pattern.permute.xlu0 0
    %126 = vperm.xlu0 %125, %v118
    %v127 = vpop.permute.xlu0 %126
    %v129 = vmul.f32 %v122, %v29
    %v130 = vmul.f32 %v127, %v30
    %v131 = vsel %vm40, %v129, 0.0
    %v132 = vrot.slane %v131, 4
    %v133 = vadd.f32 %v131, %v132
    %v134 = vrot.slane %v133, 2
    %v135 = vadd.f32 %v133, %v134
    %v136 = vrot.slane %v135, 1
    %v137 = vadd.f32 %v135, %v136
    %v138 = vsel %vm40, %v130, 0.0
    %v139 = vrot.slane %v138, 4
    %v140 = vadd.f32 %v138, %v139
    %v141 = vrot.slane %v140, 2
    %v142 = vadd.f32 %v140, %v141
    %v143 = vrot.slane %v142, 1
    %v144 = vadd.f32 %v142, %v143
    %v147 = vsel %vm59, %v144, %v137
    %vm149 = vcmask 254976
    %150 = vst.msk [vmem:[#allocation5] sm:$0x3] %vm149, %v147
    %v151 = vlaneseq
    %v152 = vshrl.u32 %v151, 7
    %v153 = vsub.s32 %v50, %v152
    %v154 = vrot.slane %v122, %v153
    %v155 = vlaneseq
    %v156 = vshrl.u32 %v155, 7
    %v157 = vsub.s32 %v50, %v156
    %v158 = vrot.slane %v127, %v157
    %v159 = vsel %vm59, %v158, %v154
    %161 = vst.msk [vmem:[#allocation6] sm:$0x3] %vm62, %v159
    // Predicated region
    $region14: #{tpu_custom_call.1} parent=1 // pred_check
      _
    $region15: #{tpu_custom_call.1} parent=1 // pred_check_branch
      %163 = sbr.rel (0) target = $region17
    $region16: #{tpu_custom_call.1} parent=1 // pred_region
      %s165 = ssub.s32 32, 32
      %166 = vsyncadd [#allocation4], %s165
      %s168 = sshll.u32 [#allocation5], 4
      %s169 = int_to_ptr.vmem [resolvable:$true] %s168
      %171 = dma.vmem_to_hbm [thread:$0]  %s169, 32, %s2, [#allocation4]
    $region17: #{tpu_custom_call.1} parent=1 // pred_fallthru
      _
    // Predicated region
    $region18: #{tpu_custom_call.1} parent=1 // pred_check
      _
    $region19: #{tpu_custom_call.1} parent=1 // pred_check_branch
      %173 = sbr.rel (0) target = $region21
    $region20: #{tpu_custom_call.1} parent=1 // pred_region
      %s175 = ssub.s32 32, 32
      %176 = vsyncadd [#allocation7], %s175
      %s178 = sshll.u32 [#allocation6], 4
      %s179 = int_to_ptr.vmem [resolvable:$true] %s178
      %181 = dma.vmem_to_hbm [thread:$0]  %s179, 32, %s3, [#allocation7]
    $region21: #{tpu_custom_call.1} parent=1 // pred_fallthru
      _
    // Predicated region
    $region22: #{tpu_custom_call.1} parent=1 // pred_check
      _
    $region23: #{tpu_custom_call.1} parent=1 // pred_check_branch
      %183 = sbr.rel (0) target = $region25
    $region24: #{tpu_custom_call.1} parent=1 // pred_region
      %184 = dma.done [#allocation4], 32
    $region25: #{tpu_custom_call.1} parent=1 // pred_fallthru
      _
    // Predicated region
    $region26: #{tpu_custom_call.1} parent=1 // pred_check
      _
    $region27: #{tpu_custom_call.1} parent=1 // pred_check_branch
      %186 = sbr.rel (0) target = $region29
    $region28: #{tpu_custom_call.1} parent=1 // pred_region
      %187 = dma.done [#allocation7], 32
    $region29: #{tpu_custom_call.1} parent=1 // pred_fallthru
      _
    %188 = vsyncpa [#allocation3], 1
    %189 = vsyncpa [#allocation4], 1
    %190 = vsyncpa [#allocation7], 1

</llo_original>
